<compile_context>
chip_gen: v7x
topology: tpu7x:2x2x1
jax: 0.10.0
libtpu: 0.0.40
codegen_flags: <defaults>
</compile_context>

<pallas_src>
import functools

import jax
import jax.numpy as jnp
from jax.experimental import pallas as pl
from jax.experimental.pallas import tpu as pltpu

KT = 9            # temporal kernel size of unit_tcn
PAD = KT // 2     # = 4, same as int((9 - 1) / 2)
BN_EPS = 1e-5


# ----------------------------- Pallas kernel ---------------------------------
def _sthc_kernel(x_ref, xa_ref, wr_ref, wg_ref, wts_ref, bg_ref, bo_ref,
                 o_ref, pad_ref, *, v_joints):
    # x_ref:   (1, C_in, N) bf16     one batch sample, N = T*V
    # xa_ref:  (1, C_in, N) bf16     same sample with the per-frame joint adjacency applied
    # wr_ref:  (C_out, C_in) bf16    residual unit_tcn k=1 weight (BN folded)
    # wg_ref:  (C_out, C_in) bf16    gcn1 channel-projection weight
    # wts_ref: (KT, C_out, C_out)    bf16, tcn1 tap weights (BN folded)
    # bg_ref:  (C_out, 1) f32        gcn1 bias
    # bo_ref:  (C_out, 1) f32        residual bias + tcn1 bias (both added pre-relu)
    # o_ref:   (1, C_out, N) f32
    # pad_ref: (C_out, N + 2*PAD*V)  bf16 VMEM scratch, zero-padded flattened time axis
    c_out = o_ref.shape[1]
    n = o_ref.shape[2]
    v = v_joints
    e = PAD * v

    x = x_ref[0]                                                     # (C_in, N)
    xa = xa_ref[0]                                                   # (C_in, N)

    # residual unit_tcn k=1 (BN folded; its bias is merged into bo_ref).
    # TODO(synk): for very small C_in (e.g. 3) this K=C_in contraction underfills the MXU
    # and could instead be C_in broadcast-FMAs on the VPU.
    res = jnp.dot(wr_ref[...], x, preferred_element_type=jnp.float32)

    # gcn1 channel projection on the adjacency-mixed input (A applied per frame in the
    # wrapper; bg commutes through the column-normalized A so it is added here).
    y = jnp.dot(wg_ref[...], xa, preferred_element_type=jnp.float32) + bg_ref[...]

    # Zero-padded time buffer: PAD frames of zeros on each side of the flattened (T*V)
    # axis.  Only the two edge strips are zeroed (cheap: 2*PAD*V lanes) and they are
    # re-zeroed every step so the kernel is correct when the "parallel" batch axis is
    # sharded across TensorCores; the interior is fully overwritten every step.
    pad_ref[:, :e] = jnp.zeros((c_out, e), pad_ref.dtype)
    pad_ref[:, e + n:] = jnp.zeros((c_out, e), pad_ref.dtype)
    pad_ref[:, e:e + n] = y.astype(pad_ref.dtype)

    # tcn1 (unit_tcn k=9): accumulate the 9 taps directly from static lane-offset windows
    # of the padded buffer (no stacked-operand scratch, no N x N shift matrices).
    z = jnp.dot(wts_ref[0], pad_ref[:, 0:n], preferred_element_type=jnp.float32)
    for k in range(1, KT):                                           # static unroll
        z = z + jnp.dot(wts_ref[k], pad_ref[:, k * v:k * v + n],
                        preferred_element_type=jnp.float32)

    # + residual, + merged biases, relu
    o_ref[0] = jnp.maximum(z + res + bo_ref[...], 0.0).astype(o_ref.dtype)


# ------------------------------- wrapper --------------------------------------
def select_sthc_block(x, N_unused, params):
    """x: (B, C_in, T, V) float32.  N_unused mirrors the unused `N` arg of forward()."""
    del N_unused
    A, wr, wg, wts, bg_col, bo_col = params
    B, c_in, T, V = x.shape
    c_out = wr.shape[0]
    n = T * V
    cdt = wr.dtype                       # matmul-operand dtype (bf16)
    isz = jnp.dtype(cdt).itemsize

    # Per-frame joint adjacency applied to the INPUT here (tiny V x V mix done by XLA);
    # valid because the channel projection commutes with it and A is column-normalized
    # so the gcn bias commutes too.  This keeps all N^2-sized operands out of the kernel.
    xA = jnp.einsum('bctw,wv->bctv', x, A)

    x2 = x.reshape(B, c_in, n).astype(cdt)      # glue reshape + bf16 cast
    xa2 = xA.reshape(B, c_in, n).astype(cdt)

    kernel = functools.partial(_sthc_kernel, v_joints=V)

    # Updated cost model: no N^2 adjacency term, no (N, N) operand bytes.
    flops = int(2 * B * n * c_out * (2 * c_in + KT * c_out))
    bytes_accessed = int(isz * (2 * B * c_in * n + wr.size + wg.size + wts.size)
                         + 4 * (B * c_out * n + bg_col.size + bo_col.size))
    cost = pl.CostEstimate(flops=flops, transcendentals=0, bytes_accessed=bytes_accessed)

    # VMEM budget: double-buffered in/out blocks + weights + padded scratch, with
    # headroom, clamped under v7x's 64 MiB physical VMEM.
    blk_bytes = 2 * c_in * n * isz + c_out * n * 4
    w_bytes = (2 * c_out * c_in + KT * c_out * c_out) * isz + 2 * c_out * 4
    pad_bytes = c_out * (n + 2 * PAD * V) * isz
    est = 2 * (blk_bytes + w_bytes) + pad_bytes
    vmem_limit = int(min(max(4 * est, 32 * 1024 * 1024), 48 * 1024 * 1024))

    grid_spec = pltpu.PrefetchScalarGridSpec(
        num_scalar_prefetch=0,
        grid=(B,),
        in_specs=[
            pl.BlockSpec((1, c_in, n), lambda b: (b, 0, 0)),
            pl.BlockSpec((1, c_in, n), lambda b: (b, 0, 0)),
            pl.BlockSpec((c_out, c_in), lambda b: (0, 0)),
            pl.BlockSpec((c_out, c_in), lambda b: (0, 0)),
            pl.BlockSpec((KT, c_out, c_out), lambda b: (0, 0, 0)),
            pl.BlockSpec((c_out, 1), lambda b: (0, 0)),
            pl.BlockSpec((c_out, 1), lambda b: (0, 0)),
        ],
        out_specs=pl.BlockSpec((1, c_out, n), lambda b: (b, 0, 0)),
        scratch_shapes=[
            pltpu.VMEM((c_out, n + 2 * PAD * V), cdt),   # zero-padded time buffer (bf16)
        ],
    )

    out2 = pl.pallas_call(
        kernel,
        out_shape=jax.ShapeDtypeStruct((B, c_out, n), jnp.float32),
        grid_spec=grid_spec,
        compiler_params=pltpu.CompilerParams(
            dimension_semantics=("parallel",),
            vmem_limit_bytes=vmem_limit),
        cost_estimate=cost,
    )(x2, xa2, wr, wg, wts, bg_col, bo_col)

    return out2.reshape(B, c_out, T, V)


# --------------------------- parameter construction ---------------------------
def make_params(key, c_in, c_out, T, V, compute_dtype=jnp.bfloat16):
    k0, k1, k2, k3, k4, k5 = jax.random.split(key, 6)

    # gcn1 stand-in parameters
    wg = jax.random.normal(k0, (c_out, c_in), jnp.float32) * (1.0 / jnp.sqrt(c_in))
    bg = jax.random.normal(k1, (c_out,), jnp.float32) * 0.05

    # normalized joint adjacency A (identity + ring), deterministic, column sums = 1
    eye_v = jnp.eye(V, dtype=jnp.float32)
    ring = jnp.roll(eye_v, 1, axis=1) + jnp.roll(eye_v, -1, axis=1)
    A = eye_v + ring
    A = A / A.sum(axis=0, keepdims=True)

    # tcn1 (unit_tcn, kernel=(9,1)) conv weight/bias, PyTorch shape (out, in, 9, 1) -> (out, in, 9)
    wt = jax.random.normal(k2, (c_out, c_out, KT), jnp.float32) * (1.0 / jnp.sqrt(c_out * KT))
    bt = jax.random.normal(k3, (c_out,), jnp.float32) * 0.05

    # residual unit_tcn (kernel_size=1) conv weight/bias
    wr = jax.random.normal(k4, (c_out, c_in), jnp.float32) * (1.0 / jnp.sqrt(c_in))
    br = jax.random.normal(k5, (c_out,), jnp.float32) * 0.05

    # BatchNorm2d (bn_init(bn, 1)): gamma=1, beta=0, running_mean=0, running_var=1
    # -> inference BN is a per-channel affine folded into the conv weights.
    scale = 1.0 / jnp.sqrt(1.0 + BN_EPS)
    wt_eff = wt * scale
    bt_eff = bt * scale
    wr_eff = wr * scale
    br_eff = br * scale

    # --- packed kernel params (matmul weights in bf16, biases in f32) ---
    wts = jnp.moveaxis(wt_eff, 2, 0)                   # (KT, C_out, C_out)
    bo = br_eff + bt_eff                               # residual + tcn biases, added pre-relu
    kernel_params = (A,
                     wr_eff.astype(compute_dtype),
                     wg.astype(compute_dtype),
                     wts.astype(compute_dtype),
                     bg[:, None],
                     bo[:, None])
    ref_params = (wg, bg, A, wt_eff, bt_eff, wr_eff, br_eff)
    return kernel_params, ref_params


# ------------------------------ pure-JAX reference -----------------------------
def ref_forward(x, wg, bg, A, wt_eff, bt_eff, wr_eff, br_eff,
                compute_dtype=jnp.bfloat16):
    """Module forward in the commuted form the kernel uses (mathematically identical to
    gcn-then-adjacency because A is column-normalized), with matmul operands quantized to
    bf16 exactly where the kernel quantizes them (bf16 x bf16 -> f32 MXU semantics), so the
    comparison isolates the kernel structure rather than mixed-precision rounding."""
    q = lambda a: a.astype(compute_dtype).astype(jnp.float32)
    B, c_in, T, V = x.shape
    res = jnp.einsum('oc,bctv->botv', q(wr_eff), q(x)) + br_eff[None, :, None, None]
    xA = jnp.einsum('bctw,wv->bctv', x, A)                     # joint adjacency mix (f32)
    y = jnp.einsum('oc,bctv->botv', q(wg), q(xA)) + bg[None, :, None, None]
    yq = q(y)
    ypad = jnp.pad(yq, ((0, 0), (0, 0), (PAD, PAD), (0, 0)))
    z = jnp.zeros_like(y)
    for k in range(KT):
        z = z + jnp.einsum('oc,bctv->botv', q(wt_eff[:, :, k]), ypad[:, :, k:k + T, :])
    z = z + bt_eff[None, :, None, None]
    return jnp.maximum(z + res, 0.0)


# ----------------------------------- main --------------------------------------
if __name__ == "__main__":
    B, C_IN, C_OUT, T, V = 2, 4, 8, 16, 16   # (batch, in_ch, out_ch, num_frame, num_point)

    key = jax.random.PRNGKey(0)
    kx, kp = jax.random.split(key)
    x = jax.random.normal(kx, (B, C_IN, T, V), jnp.float32)
    kernel_params, ref_params = make_params(kp, C_IN, C_OUT, T, V)

    out = select_sthc_block(x, B, kernel_params)
    out = jax.block_until_ready(out)

    ref = ref_forward(x, *ref_params)
    assert out.shape == (B, C_OUT, T, V)
    assert jnp.allclose(out, ref, rtol=1e-2, atol=1e-2), \
        f"max abs err = {float(jnp.max(jnp.abs(out - ref)))}"

    print("KERNEL_OK")
</pallas_src>

<mosaic_0001>
module attributes {stable_mosaic.version = 11 : i64} {
  func.func @_sthc_kernel(%arg0: i32, %arg1: memref<1x4x256xbf16, #tpu.memory_space<vmem>>, %arg2: memref<1x4x256xbf16, #tpu.memory_space<vmem>>, %arg3: memref<8x4xbf16, #tpu.memory_space<vmem>>, %arg4: memref<8x4xbf16, #tpu.memory_space<vmem>>, %arg5: memref<9x8x8xbf16, #tpu.memory_space<vmem>>, %arg6: memref<8x1xf32, #tpu.memory_space<vmem>>, %arg7: memref<8x1xf32, #tpu.memory_space<vmem>>, %arg8: memref<1x8x256xf32, #tpu.memory_space<vmem>>, %arg9: memref<8x384xbf16, #tpu.memory_space<vmem>>) attributes {dimension_semantics = [#tpu.dimension_semantics<parallel>], iteration_bounds = array<i64: 2>, scalar_prefetch = 0 : i64, scratch_operands = 1 : i64, tpu.core_type = #tpu.core_type<tc>, window_params = [{transform_indices = @transform_0, window_bounds = array<i64: 1, 4, 256>}, {transform_indices = @transform_1, window_bounds = array<i64: 1, 4, 256>}, {pipeline_mode = #tpu.pipeline_mode<synchronous>, transform_indices = @transform_2, window_bounds = array<i64: 8, 4>}, {pipeline_mode = #tpu.pipeline_mode<synchronous>, transform_indices = @transform_3, window_bounds = array<i64: 8, 4>}, {pipeline_mode = #tpu.pipeline_mode<synchronous>, transform_indices = @transform_4, window_bounds = array<i64: 9, 8, 8>}, {pipeline_mode = #tpu.pipeline_mode<synchronous>, transform_indices = @transform_5, window_bounds = array<i64: 8, 1>}, {pipeline_mode = #tpu.pipeline_mode<synchronous>, transform_indices = @transform_6, window_bounds = array<i64: 8, 1>}, {transform_indices = @transform_7, window_bounds = array<i64: 1, 8, 256>}]} {
    %c0 = arith.constant 0 : index
    %c0_0 = arith.constant 0 : index
    %c0_1 = arith.constant 0 : index
    %0 = vector.load %arg1[%c0, %c0_0, %c0_1] : memref<1x4x256xbf16, #tpu.memory_space<vmem>>, vector<1x4x256xbf16>
    %1 = vector.shape_cast %0 : vector<1x4x256xbf16> to vector<4x256xbf16>
    %c0_2 = arith.constant 0 : index
    %c0_3 = arith.constant 0 : index
    %c0_4 = arith.constant 0 : index
    %2 = vector.load %arg2[%c0_2, %c0_3, %c0_4] : memref<1x4x256xbf16, #tpu.memory_space<vmem>>, vector<1x4x256xbf16>
    %3 = vector.shape_cast %2 : vector<1x4x256xbf16> to vector<4x256xbf16>
    %c0_5 = arith.constant 0 : index
    %c0_6 = arith.constant 0 : index
    %4 = vector.load %arg3[%c0_5, %c0_6] : memref<8x4xbf16, #tpu.memory_space<vmem>>, vector<8x4xbf16>
    %cst = arith.constant dense<0.000000e+00> : vector<8x256xf32>
    %5 = tpu.matmul %4, %1, %cst {dimension_numbers = #tpu.dot_dimension_numbers<[1], [0], [0], [1], [0, 0, 1, 1], [], []>} : vector<8x4xbf16>, vector<4x256xbf16>, vector<8x256xf32> -> vector<8x256xf32>
    %c0_7 = arith.constant 0 : index
    %c0_8 = arith.constant 0 : index
    %6 = vector.load %arg4[%c0_7, %c0_8] : memref<8x4xbf16, #tpu.memory_space<vmem>>, vector<8x4xbf16>
    %cst_9 = arith.constant dense<0.000000e+00> : vector<8x256xf32>
    %7 = tpu.matmul %6, %3, %cst_9 {dimension_numbers = #tpu.dot_dimension_numbers<[1], [0], [0], [1], [0, 0, 1, 1], [], []>} : vector<8x4xbf16>, vector<4x256xbf16>, vector<8x256xf32> -> vector<8x256xf32>
    %c0_10 = arith.constant 0 : index
    %c0_11 = arith.constant 0 : index
    %8 = vector.load %arg6[%c0_10, %c0_11] : memref<8x1xf32, #tpu.memory_space<vmem>>, vector<8x1xf32>
    %9 = vector.broadcast %8 : vector<8x1xf32> to vector<8x256xf32>
    %10 = arith.addf %7, %9 : vector<8x256xf32>
    %cst_12 = arith.constant 0.000000e+00 : bf16
    %11 = vector.broadcast %cst_12 : bf16 to vector<8x64xbf16>
    %c0_13 = arith.constant 0 : index
    %c0_14 = arith.constant 0 : index
    %12 = vector.load %arg9[%c0_13, %c0_14] : memref<8x384xbf16, #tpu.memory_space<vmem>>, vector<8x64xbf16>
    tpu.vector_store %arg9[%c0_13, %c0_14], %11 {strides = array<i32>} : memref<8x384xbf16, #tpu.memory_space<vmem>>, vector<8x64xbf16>,
    %cst_15 = arith.constant 0.000000e+00 : bf16
    %13 = vector.broadcast %cst_15 : bf16 to vector<8x64xbf16>
    %c0_16 = arith.constant 0 : index
    %c320 = arith.constant 320 : index
    %14 = vector.load %arg9[%c0_16, %c320] : memref<8x384xbf16, #tpu.memory_space<vmem>>, vector<8x64xbf16>
    tpu.vector_store %arg9[%c0_16, %c320], %13 {strides = array<i32>} : memref<8x384xbf16, #tpu.memory_space<vmem>>, vector<8x64xbf16>,
    %15 = arith.truncf %10 : vector<8x256xf32> to vector<8x256xbf16>
    %c0_17 = arith.constant 0 : index
    %c64 = arith.constant 64 : index
    %16 = vector.load %arg9[%c0_17, %c64] : memref<8x384xbf16, #tpu.memory_space<vmem>>, vector<8x256xbf16>
    tpu.vector_store %arg9[%c0_17, %c64], %15 {strides = array<i32>} : memref<8x384xbf16, #tpu.memory_space<vmem>>, vector<8x256xbf16>,
    %c0_18 = arith.constant 0 : index
    %c0_19 = arith.constant 0 : index
    %c0_20 = arith.constant 0 : index
    %17 = vector.load %arg5[%c0_18, %c0_19, %c0_20] : memref<9x8x8xbf16, #tpu.memory_space<vmem>>, vector<1x8x8xbf16>
    %18 = vector.shape_cast %17 : vector<1x8x8xbf16> to vector<8x8xbf16>
    %c0_21 = arith.constant 0 : index
    %c0_22 = arith.constant 0 : index
    %19 = vector.load %arg9[%c0_21, %c0_22] : memref<8x384xbf16, #tpu.memory_space<vmem>>, vector<8x256xbf16>
    %cst_23 = arith.constant dense<0.000000e+00> : vector<8x256xf32>
    %20 = tpu.matmul %18, %19, %cst_23 {dimension_numbers = #tpu.dot_dimension_numbers<[1], [0], [0], [1], [0, 0, 1, 1], [], []>} : vector<8x8xbf16>, vector<8x256xbf16>, vector<8x256xf32> -> vector<8x256xf32>
    %c1 = arith.constant 1 : index
    %c0_24 = arith.constant 0 : index
    %c0_25 = arith.constant 0 : index
    %21 = vector.load %arg5[%c1, %c0_24, %c0_25] : memref<9x8x8xbf16, #tpu.memory_space<vmem>>, vector<1x8x8xbf16>
    %22 = vector.shape_cast %21 : vector<1x8x8xbf16> to vector<8x8xbf16>
    %c0_26 = arith.constant 0 : index
    %c16 = arith.constant 16 : index
    %23 = vector.load %arg9[%c0_26, %c16] : memref<8x384xbf16, #tpu.memory_space<vmem>>, vector<8x256xbf16>
    %cst_27 = arith.constant dense<0.000000e+00> : vector<8x256xf32>
    %24 = tpu.matmul %22, %23, %cst_27 {dimension_numbers = #tpu.dot_dimension_numbers<[1], [0], [0], [1], [0, 0, 1, 1], [], []>} : vector<8x8xbf16>, vector<8x256xbf16>, vector<8x256xf32> -> vector<8x256xf32>
    %25 = arith.addf %20, %24 : vector<8x256xf32>
    %c2 = arith.constant 2 : index
    %c0_28 = arith.constant 0 : index
    %c0_29 = arith.constant 0 : index
    %26 = vector.load %arg5[%c2, %c0_28, %c0_29] : memref<9x8x8xbf16, #tpu.memory_space<vmem>>, vector<1x8x8xbf16>
    %27 = vector.shape_cast %26 : vector<1x8x8xbf16> to vector<8x8xbf16>
    %c0_30 = arith.constant 0 : index
    %c32 = arith.constant 32 : index
    %28 = vector.load %arg9[%c0_30, %c32] : memref<8x384xbf16, #tpu.memory_space<vmem>>, vector<8x256xbf16>
    %cst_31 = arith.constant dense<0.000000e+00> : vector<8x256xf32>
    %29 = tpu.matmul %27, %28, %cst_31 {dimension_numbers = #tpu.dot_dimension_numbers<[1], [0], [0], [1], [0, 0, 1, 1], [], []>} : vector<8x8xbf16>, vector<8x256xbf16>, vector<8x256xf32> -> vector<8x256xf32>
    %30 = arith.addf %25, %29 : vector<8x256xf32>
    %c3 = arith.constant 3 : index
    %c0_32 = arith.constant 0 : index
    %c0_33 = arith.constant 0 : index
    %31 = vector.load %arg5[%c3, %c0_32, %c0_33] : memref<9x8x8xbf16, #tpu.memory_space<vmem>>, vector<1x8x8xbf16>
    %32 = vector.shape_cast %31 : vector<1x8x8xbf16> to vector<8x8xbf16>
    %c0_34 = arith.constant 0 : index
    %c48 = arith.constant 48 : index
    %33 = vector.load %arg9[%c0_34, %c48] : memref<8x384xbf16, #tpu.memory_space<vmem>>, vector<8x256xbf16>
    %cst_35 = arith.constant dense<0.000000e+00> : vector<8x256xf32>
    %34 = tpu.matmul %32, %33, %cst_35 {dimension_numbers = #tpu.dot_dimension_numbers<[1], [0], [0], [1], [0, 0, 1, 1], [], []>} : vector<8x8xbf16>, vector<8x256xbf16>, vector<8x256xf32> -> vector<8x256xf32>
    %35 = arith.addf %30, %34 : vector<8x256xf32>
    %c4 = arith.constant 4 : index
    %c0_36 = arith.constant 0 : index
    %c0_37 = arith.constant 0 : index
    %36 = vector.load %arg5[%c4, %c0_36, %c0_37] : memref<9x8x8xbf16, #tpu.memory_space<vmem>>, vector<1x8x8xbf16>
    %37 = vector.shape_cast %36 : vector<1x8x8xbf16> to vector<8x8xbf16>
    %c0_38 = arith.constant 0 : index
    %c64_39 = arith.constant 64 : index
    %38 = vector.load %arg9[%c0_38, %c64_39] : memref<8x384xbf16, #tpu.memory_space<vmem>>, vector<8x256xbf16>
    %cst_40 = arith.constant dense<0.000000e+00> : vector<8x256xf32>
    %39 = tpu.matmul %37, %38, %cst_40 {dimension_numbers = #tpu.dot_dimension_numbers<[1], [0], [0], [1], [0, 0, 1, 1], [], []>} : vector<8x8xbf16>, vector<8x256xbf16>, vector<8x256xf32> -> vector<8x256xf32>
    %40 = arith.addf %35, %39 : vector<8x256xf32>
    %c5 = arith.constant 5 : index
    %c0_41 = arith.constant 0 : index
    %c0_42 = arith.constant 0 : index
    %41 = vector.load %arg5[%c5, %c0_41, %c0_42] : memref<9x8x8xbf16, #tpu.memory_space<vmem>>, vector<1x8x8xbf16>
    %42 = vector.shape_cast %41 : vector<1x8x8xbf16> to vector<8x8xbf16>
    %c0_43 = arith.constant 0 : index
    %c80 = arith.constant 80 : index
    %43 = vector.load %arg9[%c0_43, %c80] : memref<8x384xbf16, #tpu.memory_space<vmem>>, vector<8x256xbf16>
    %cst_44 = arith.constant dense<0.000000e+00> : vector<8x256xf32>
    %44 = tpu.matmul %42, %43, %cst_44 {dimension_numbers = #tpu.dot_dimension_numbers<[1], [0], [0], [1], [0, 0, 1, 1], [], []>} : vector<8x8xbf16>, vector<8x256xbf16>, vector<8x256xf32> -> vector<8x256xf32>
    %45 = arith.addf %40, %44 : vector<8x256xf32>
    %c6 = arith.constant 6 : index
    %c0_45 = arith.constant 0 : index
    %c0_46 = arith.constant 0 : index
    %46 = vector.load %arg5[%c6, %c0_45, %c0_46] : memref<9x8x8xbf16, #tpu.memory_space<vmem>>, vector<1x8x8xbf16>
    %47 = vector.shape_cast %46 : vector<1x8x8xbf16> to vector<8x8xbf16>
    %c0_47 = arith.constant 0 : index
    %c96 = arith.constant 96 : index
    %48 = vector.load %arg9[%c0_47, %c96] : memref<8x384xbf16, #tpu.memory_space<vmem>>, vector<8x256xbf16>
    %cst_48 = arith.constant dense<0.000000e+00> : vector<8x256xf32>
    %49 = tpu.matmul %47, %48, %cst_48 {dimension_numbers = #tpu.dot_dimension_numbers<[1], [0], [0], [1], [0, 0, 1, 1], [], []>} : vector<8x8xbf16>, vector<8x256xbf16>, vector<8x256xf32> -> vector<8x256xf32>
    %50 = arith.addf %45, %49 : vector<8x256xf32>
    %c7 = arith.constant 7 : index
    %c0_49 = arith.constant 0 : index
    %c0_50 = arith.constant 0 : index
    %51 = vector.load %arg5[%c7, %c0_49, %c0_50] : memref<9x8x8xbf16, #tpu.memory_space<vmem>>, vector<1x8x8xbf16>
    %52 = vector.shape_cast %51 : vector<1x8x8xbf16> to vector<8x8xbf16>
    %c0_51 = arith.constant 0 : index
    %c112 = arith.constant 112 : index
    %53 = vector.load %arg9[%c0_51, %c112] : memref<8x384xbf16, #tpu.memory_space<vmem>>, vector<8x256xbf16>
    %cst_52 = arith.constant dense<0.000000e+00> : vector<8x256xf32>
    %54 = tpu.matmul %52, %53, %cst_52 {dimension_numbers = #tpu.dot_dimension_numbers<[1], [0], [0], [1], [0, 0, 1, 1], [], []>} : vector<8x8xbf16>, vector<8x256xbf16>, vector<8x256xf32> -> vector<8x256xf32>
    %55 = arith.addf %50, %54 : vector<8x256xf32>
    %c8 = arith.constant 8 : index
    %c0_53 = arith.constant 0 : index
    %c0_54 = arith.constant 0 : index
    %56 = vector.load %arg5[%c8, %c0_53, %c0_54] : memref<9x8x8xbf16, #tpu.memory_space<vmem>>, vector<1x8x8xbf16>
    %57 = vector.shape_cast %56 : vector<1x8x8xbf16> to vector<8x8xbf16>
    %c0_55 = arith.constant 0 : index
    %c128 = arith.constant 128 : index
    %58 = vector.load %arg9[%c0_55, %c128] : memref<8x384xbf16, #tpu.memory_space<vmem>>, vector<8x256xbf16>
    %cst_56 = arith.constant dense<0.000000e+00> : vector<8x256xf32>
    %59 = tpu.matmul %57, %58, %cst_56 {dimension_numbers = #tpu.dot_dimension_numbers<[1], [0], [0], [1], [0, 0, 1, 1], [], []>} : vector<8x8xbf16>, vector<8x256xbf16>, vector<8x256xf32> -> vector<8x256xf32>
    %60 = arith.addf %55, %59 : vector<8x256xf32>
    %61 = arith.addf %60, %5 : vector<8x256xf32>
    %c0_57 = arith.constant 0 : index
    %c0_58 = arith.constant 0 : index
    %62 = vector.load %arg7[%c0_57, %c0_58] : memref<8x1xf32, #tpu.memory_space<vmem>>, vector<8x1xf32>
    %63 = vector.broadcast %62 : vector<8x1xf32> to vector<8x256xf32>
    %64 = arith.addf %61, %63 : vector<8x256xf32>
    %cst_59 = arith.constant 0.000000e+00 : f32
    %65 = vector.broadcast %cst_59 : f32 to vector<8x256xf32>
    %66 = arith.maximumf %64, %65 : vector<8x256xf32>
    %c0_60 = arith.constant 0 : index
    %c0_61 = arith.constant 0 : index
    %c0_62 = arith.constant 0 : index
    %67 = vector.load %arg8[%c0_60, %c0_61, %c0_62] : memref<1x8x256xf32, #tpu.memory_space<vmem>>, vector<1x8x256xf32>
    %68 = vector.shape_cast %67 : vector<1x8x256xf32> to vector<8x256xf32>
    %69 = vector.shape_cast %66 : vector<8x256xf32> to vector<1x8x256xf32>
    tpu.vector_store %arg8[%c0_60, %c0_61, %c0_62], %69 {strides = array<i32>} : memref<1x8x256xf32, #tpu.memory_space<vmem>>, vector<1x8x256xf32>,
    return
  }
  func.func @transform_0(%arg0: i32) -> (i32, i32, i32) {
    %c0_i32 = arith.constant 0 : i32
    %c0_i32_0 = arith.constant 0 : i32
    %c0_i32_1 = arith.constant 0 : i32
    return %arg0, %c0_i32, %c0_i32_0 : i32, i32, i32
  }
  func.func @transform_1(%arg0: i32) -> (i32, i32, i32) {
    %c0_i32 = arith.constant 0 : i32
    %c0_i32_0 = arith.constant 0 : i32
    %c0_i32_1 = arith.constant 0 : i32
    return %arg0, %c0_i32, %c0_i32_0 : i32, i32, i32
  }
  func.func @transform_2(%arg0: i32) -> (i32, i32) {
    %c0_i32 = arith.constant 0 : i32
    %c0_i32_0 = arith.constant 0 : i32
    %c0_i32_1 = arith.constant 0 : i32
    return %c0_i32, %c0_i32_0 : i32, i32
  }
  func.func @transform_3(%arg0: i32) -> (i32, i32) {
    %c0_i32 = arith.constant 0 : i32
    %c0_i32_0 = arith.constant 0 : i32
    %c0_i32_1 = arith.constant 0 : i32
    return %c0_i32, %c0_i32_0 : i32, i32
  }
  func.func @transform_4(%arg0: i32) -> (i32, i32, i32) {
    %c0_i32 = arith.constant 0 : i32
    %c0_i32_0 = arith.constant 0 : i32
    %c0_i32_1 = arith.constant 0 : i32
    %c0_i32_2 = arith.constant 0 : i32
    return %c0_i32, %c0_i32_0, %c0_i32_1 : i32, i32, i32
  }
  func.func @transform_5(%arg0: i32) -> (i32, i32) {
    %c0_i32 = arith.constant 0 : i32
    %c0_i32_0 = arith.constant 0 : i32
    %c0_i32_1 = arith.constant 0 : i32
    return %c0_i32, %c0_i32_0 : i32, i32
  }
  func.func @transform_6(%arg0: i32) -> (i32, i32) {
    %c0_i32 = arith.constant 0 : i32
    %c0_i32_0 = arith.constant 0 : i32
    %c0_i32_1 = arith.constant 0 : i32
    return %c0_i32, %c0_i32_0 : i32, i32
  }
  func.func @transform_7(%arg0: i32) -> (i32, i32, i32) {
    %c0_i32 = arith.constant 0 : i32
    %c0_i32_0 = arith.constant 0 : i32
    %c0_i32_1 = arith.constant 0 : i32
    return %arg0, %c0_i32, %c0_i32_0 : i32, i32, i32
  }
}

</mosaic_0001>

<llo_original>
// kernel: tpu_custom_call.1
$region0: #{tpu_custom_call.1}
  #allocation0 [shape = 'u32[]', space=smem, size = 0x4, offset = 0x4, fixed_abs, tag = 'smem constant byte address 0x4 - core index']
  #allocation1 [shape = 'u32[144,128]{1,0:T(1,128)}', space=vmem, size = 0x12000, scoped, tag = 'internal scratch']
  #allocation2 [shape = 'bf16[8,384]{1,0:T(8,128)(2,1)}', space=vmem, size = 0x1800, scoped, tag = 'scratch operand']
  %s0 = inlined_call_operand.vmem [shape: bf16[2,4,256], index: 0, kind: input, shape index: {}]
  %s1 = inlined_call_operand.vmem [shape: bf16[2,4,256], index: 1, kind: input, shape index: {}]
  %s2 = inlined_call_operand.vmem [shape: bf16[8,4], index: 2, kind: input, shape index: {}]
  %s3 = inlined_call_operand.vmem [shape: bf16[8,4], index: 3, kind: input, shape index: {}]
  %s4 = inlined_call_operand.vmem [shape: bf16[9,8,8], index: 4, kind: input, shape index: {}]
  %s5 = inlined_call_operand.vmem [shape: f32[8,1], index: 5, kind: input, shape index: {}]
  %s6 = inlined_call_operand.vmem [shape: f32[8,1], index: 6, kind: input, shape index: {}]
  %s7 = inlined_call_operand.hbm [shape: f32[2,8,256], index: 7, kind: output, shape index: {}]
  %s8 = sld [smem:[#allocation0]]
  $region61: #{tpu_custom_call.1} parent=0
    _
  %s10 = ssub.s32 1, %s8
  %s11 = scalar_select 0, %s10, %s8
  $region1: #{tpu_custom_call.1} parent=0
    #allocation3 [shape = 'u8[16384]{0}', space=vmem, size = 0x4000, scoped, tag = 'output window, operand 0']
    #allocation4 [shape = 's32[2]{0}', space=sflag, size = 0x8, scoped, tag = 'scoped memory for tpu_custom_call.1']
    %12 = vsyncpa [#allocation4], 0
    %s13 = scalar_lea.sflag [#allocation4], 1
    %14 = vsyncpa %s13, 0
    loop: start=0, step=1, limit=4
    $region2: #{tpu_custom_call.1} parent=1 // loop_pre_header
      _
    $region3: #{tpu_custom_call.1} parent=1 // loop_header
      %s16 = sphi 0, %s20
      %p17 = scmp.ge.s32.totalorder %s16, 4
      %s26 = sphi 0, %s28
      %s29 = sphi 0, %s26
      %s30 = sphi 0, %s29
      %s46 = sphi 0, %s30
      %s52 = sphi 0, %s54
      %s55 = sphi 0, %s52
      %s56 = sphi 0, %s55
      %s72 = sphi 0, %s56
      %s76 = sphi 0, %s76
      %s78 = sphi 0, %s76
      %s79 = sphi 0, %s78
      %s93 = sphi 0, %s79
      %s97 = sphi 0, %s97
      %s99 = sphi 0, %s97
      %s100 = sphi 0, %s99
      %s114 = sphi 0, %s100
      %s118 = sphi 0, %s118
      %s120 = sphi 0, %s118
      %s121 = sphi 0, %s120
      %s135 = sphi 0, %s121
      %s139 = sphi 0, %s139
      %s141 = sphi 0, %s139
      %s142 = sphi 0, %s141
      %s156 = sphi 0, %s142
      %s160 = sphi 0, %s160
      %s162 = sphi 0, %s160
      %s163 = sphi 0, %s162
      %s177 = sphi 0, %s163
      %s183 = sphi 0, %s185
      %s186 = sphi 0, %s183
      %s187 = sphi 0, %s186
      %s203 = sphi 0, %s187
    $region4: #{tpu_custom_call.1} parent=1 // loop_header_branch
      %19 = sbr.rel (%p17) target = $region8
    $region5: #{tpu_custom_call.1} parent=1 // loop_body
      %s21 = ssub.s32 %s16, 1
      %s22 = ssub.s32 %s16, 2
      %s23 = sadd.s32 %s16, 1
      %s24 = ssub.s32 %s16, %s23
      %p25 = scmp.eq.s32.totalorder %s24, 0
      %s27 = sadd.s32 %s26, 1
      %s28 = scalar_select %p25, %s26, %s27
      %p31 = pneg %p25
      %p32 = scmp.eq.s32.totalorder %s16, 1
      %p33 = por %p31, %p32
      %p34 = scmp.ne.s32.totalorder %s26, %s29
      %p35 = scmp.eq.s32.totalorder %s16, 0
      %p36 = por %p34, %p35
      %p37 = scmp.ne.s32.totalorder %s26, %s29
      %p38 = scmp.eq.s32.totalorder %s21, 1
      %p39 = por %p37, %p38
      %p40 = scmp.ne.s32.totalorder %s29, %s30
      %p41 = scmp.eq.s32.totalorder %s21, 0
      %p42 = por %p40, %p41
      %p43 = scmp.ne.s32.totalorder %s29, %s30
      %p44 = scmp.eq.s32.totalorder %s22, 1
      %p45 = por %p43, %p44
      %p47 = scmp.ne.s32.totalorder %s30, %s46
      %p48 = scmp.eq.s32.totalorder %s22, 0
      %p49 = por %p47, %p48
      %s50 = ssub.s32 %s16, %s23
      %p51 = scmp.eq.s32.totalorder %s50, 0
      %s53 = sadd.s32 %s52, 1
      %s54 = scalar_select %p51, %s52, %s53
      %p57 = pneg %p51
      %p58 = scmp.eq.s32.totalorder %s16, 1
      %p59 = por %p57, %p58
      %p60 = scmp.ne.s32.totalorder %s52, %s55
      %p61 = scmp.eq.s32.totalorder %s16, 0
      %p62 = por %p60, %p61
      %p63 = scmp.ne.s32.totalorder %s52, %s55
      %p64 = scmp.eq.s32.totalorder %s21, 1
      %p65 = por %p63, %p64
      %p66 = scmp.ne.s32.totalorder %s55, %s56
      %p67 = scmp.eq.s32.totalorder %s21, 0
      %p68 = por %p66, %p67
      %p69 = scmp.ne.s32.totalorder %s55, %s56
      %p70 = scmp.eq.s32.totalorder %s22, 1
      %p71 = por %p69, %p70
      %p73 = scmp.ne.s32.totalorder %s56, %s72
      %p74 = scmp.eq.s32.totalorder %s22, 0
      %p75 = por %p73, %p74
      %s77 = sadd.s32 %s76, 1
      %p80 = scmp.eq.s32.totalorder %s16, 1
      %p81 = scmp.ne.s32.totalorder %s76, %s78
      %p82 = scmp.eq.s32.totalorder %s16, 0
      %p83 = por %p81, %p82
      %p84 = scmp.ne.s32.totalorder %s76, %s78
      %p85 = scmp.eq.s32.totalorder %s21, 1
      %p86 = por %p84, %p85
      %p87 = scmp.ne.s32.totalorder %s78, %s79
      %p88 = scmp.eq.s32.totalorder %s21, 0
      %p89 = por %p87, %p88
      %p90 = scmp.ne.s32.totalorder %s78, %s79
      %p91 = scmp.eq.s32.totalorder %s22, 1
      %p92 = por %p90, %p91
      %p94 = scmp.ne.s32.totalorder %s79, %s93
      %p95 = scmp.eq.s32.totalorder %s22, 0
      %p96 = por %p94, %p95
      %s98 = sadd.s32 %s97, 1
      %p101 = scmp.eq.s32.totalorder %s16, 1
      %p102 = scmp.ne.s32.totalorder %s97, %s99
      %p103 = scmp.eq.s32.totalorder %s16, 0
      %p104 = por %p102, %p103
      %p105 = scmp.ne.s32.totalorder %s97, %s99
      %p106 = scmp.eq.s32.totalorder %s21, 1
      %p107 = por %p105, %p106
      %p108 = scmp.ne.s32.totalorder %s99, %s100
      %p109 = scmp.eq.s32.totalorder %s21, 0
      %p110 = por %p108, %p109
      %p111 = scmp.ne.s32.totalorder %s99, %s100
      %p112 = scmp.eq.s32.totalorder %s22, 1
      %p113 = por %p111, %p112
      %p115 = scmp.ne.s32.totalorder %s100, %s114
      %p116 = scmp.eq.s32.totalorder %s22, 0
      %p117 = por %p115, %p116
      %s119 = sadd.s32 %s118, 1
      %p122 = scmp.eq.s32.totalorder %s16, 1
      %p123 = scmp.ne.s32.totalorder %s118, %s120
      %p124 = scmp.eq.s32.totalorder %s16, 0
      %p125 = por %p123, %p124
      %p126 = scmp.ne.s32.totalorder %s118, %s120
      %p127 = scmp.eq.s32.totalorder %s21, 1
      %p128 = por %p126, %p127
      %p129 = scmp.ne.s32.totalorder %s120, %s121
      %p130 = scmp.eq.s32.totalorder %s21, 0
      %p131 = por %p129, %p130
      %p132 = scmp.ne.s32.totalorder %s120, %s121
      %p133 = scmp.eq.s32.totalorder %s22, 1
      %p134 = por %p132, %p133
      %p136 = scmp.ne.s32.totalorder %s121, %s135
      %p137 = scmp.eq.s32.totalorder %s22, 0
      %p138 = por %p136, %p137
      %s140 = sadd.s32 %s139, 1
      %p143 = scmp.eq.s32.totalorder %s16, 1
      %p144 = scmp.ne.s32.totalorder %s139, %s141
      %p145 = scmp.eq.s32.totalorder %s16, 0
      %p146 = por %p144, %p145
      %p147 = scmp.ne.s32.totalorder %s139, %s141
      %p148 = scmp.eq.s32.totalorder %s21, 1
      %p149 = por %p147, %p148
      %p150 = scmp.ne.s32.totalorder %s141, %s142
      %p151 = scmp.eq.s32.totalorder %s21, 0
      %p152 = por %p150, %p151
      %p153 = scmp.ne.s32.totalorder %s141, %s142
      %p154 = scmp.eq.s32.totalorder %s22, 1
      %p155 = por %p153, %p154
      %p157 = scmp.ne.s32.totalorder %s142, %s156
      %p158 = scmp.eq.s32.totalorder %s22, 0
      %p159 = por %p157, %p158
      %s161 = sadd.s32 %s160, 1
      %p164 = scmp.eq.s32.totalorder %s16, 1
      %p165 = scmp.ne.s32.totalorder %s160, %s162
      %p166 = scmp.eq.s32.totalorder %s16, 0
      %p167 = por %p165, %p166
      %p168 = scmp.ne.s32.totalorder %s160, %s162
      %p169 = scmp.eq.s32.totalorder %s21, 1
      %p170 = por %p168, %p169
      %p171 = scmp.ne.s32.totalorder %s162, %s163
      %p172 = scmp.eq.s32.totalorder %s21, 0
      %p173 = por %p171, %p172
      %p174 = scmp.ne.s32.totalorder %s162, %s163
      %p175 = scmp.eq.s32.totalorder %s22, 1
      %p176 = por %p174, %p175
      %p178 = scmp.ne.s32.totalorder %s163, %s177
      %p179 = scmp.eq.s32.totalorder %s22, 0
      %p180 = por %p178, %p179
      %s181 = ssub.s32 %s16, %s23
      %p182 = scmp.eq.s32.totalorder %s181, 0
      %s184 = sadd.s32 %s183, 1
      %s185 = scalar_select %p182, %s183, %s184
      %p188 = pneg %p182
      %p189 = scmp.eq.s32.totalorder %s16, 1
      %p190 = por %p188, %p189
      %p191 = scmp.ne.s32.totalorder %s183, %s186
      %p192 = scmp.eq.s32.totalorder %s16, 0
      %p193 = por %p191, %p192
      %p194 = scmp.ne.s32.totalorder %s183, %s186
      %p195 = scmp.eq.s32.totalorder %s21, 1
      %p196 = por %p194, %p195
      %p197 = scmp.ne.s32.totalorder %s186, %s187
      %p198 = scmp.eq.s32.totalorder %s21, 0
      %p199 = por %p197, %p198
      %p200 = scmp.ne.s32.totalorder %s186, %s187
      %p201 = scmp.eq.s32.totalorder %s22, 1
      %p202 = por %p200, %p201
      %p204 = scmp.ne.s32.totalorder %s187, %s203
      %p205 = scmp.eq.s32.totalorder %s22, 0
      %p206 = por %p204, %p205
      %p207 = scmp.le.s32.totalorder 1, %s16
      %p208 = scmp.lt.s32.totalorder %s16, 3
      %p209 = pnand %p207, %p208
      %p210 = pneg %p209
      // Predicated region
      $region9: #{tpu_custom_call.1} parent=5 // pred_check
        _
      $region10: #{tpu_custom_call.1} parent=5 // pred_check_branch
        %212 = sbr.rel (%p209) target = $region12
      $region11: #{tpu_custom_call.1} parent=5 // pred_region
        %s213 = ssub.s32 %s16, 1
        // Predicated region
        $region13: #{tpu_custom_call.1} parent=11 // pred_check
          %p214 = pneg %p89
        $region14: #{tpu_custom_call.1} parent=11 // pred_check_branch
          %216 = sbr.rel (%p214) target = $region16
        $region15: #{tpu_custom_call.1} parent=11 // pred_region
          _
        $region16: #{tpu_custom_call.1} parent=11 // pred_fallthru
          _
        // Predicated region
        $region17: #{tpu_custom_call.1} parent=11 // pred_check
          %p217 = pneg %p110
        $region18: #{tpu_custom_call.1} parent=11 // pred_check_branch
          %219 = sbr.rel (%p217) target = $region20
        $region19: #{tpu_custom_call.1} parent=11 // pred_region
          _
        $region20: #{tpu_custom_call.1} parent=11 // pred_fallthru
          _
        // Predicated region
        $region21: #{tpu_custom_call.1} parent=11 // pred_check
          %p220 = pneg %p131
        $region22: #{tpu_custom_call.1} parent=11 // pred_check_branch
          %222 = sbr.rel (%p220) target = $region24
        $region23: #{tpu_custom_call.1} parent=11 // pred_region
          _
        $region24: #{tpu_custom_call.1} parent=11 // pred_fallthru
          _
        // Predicated region
        $region25: #{tpu_custom_call.1} parent=11 // pred_check
          %p223 = pneg %p152
        $region26: #{tpu_custom_call.1} parent=11 // pred_check_branch
          %225 = sbr.rel (%p223) target = $region28
        $region27: #{tpu_custom_call.1} parent=11 // pred_region
          _
        $region28: #{tpu_custom_call.1} parent=11 // pred_fallthru
          _
        // Predicated region
        $region29: #{tpu_custom_call.1} parent=11 // pred_check
          %p226 = pneg %p173
        $region30: #{tpu_custom_call.1} parent=11 // pred_check_branch
          %228 = sbr.rel (%p226) target = $region32
        $region31: #{tpu_custom_call.1} parent=11 // pred_region
          _
        $region32: #{tpu_custom_call.1} parent=11 // pred_fallthru
          _
      $region12: #{tpu_custom_call.1} parent=5 // pred_fallthru
        _
      %p229 = scmp.lt.s32.totalorder %s16, 2
      // Predicated region
      $region33: #{tpu_custom_call.1} parent=5 // pred_check
        %p230 = pneg %p229
      $region34: #{tpu_custom_call.1} parent=5 // pred_check_branch
        %232 = sbr.rel (%p230) target = $region36
      $region35: #{tpu_custom_call.1} parent=5 // pred_region
        // Predicated region
        $region37: #{tpu_custom_call.1} parent=35 // pred_check
          %p233 = pneg %p36
        $region38: #{tpu_custom_call.1} parent=35 // pred_check_branch
          %235 = sbr.rel (%p233) target = $region40
        $region39: #{tpu_custom_call.1} parent=35 // pred_region
          %p236 = scmp.lt.s32.totalorder %s16, 1
          %s237 = scalar_select %p236, %s16, 1
          %s238 = smul.addr %s237, 2
          %s239 = smul.addr %s238, 2
          %s240 = scalar_lea.vmem %s0, %s239
        $region40: #{tpu_custom_call.1} parent=35 // pred_fallthru
          _
        // Predicated region
        $region41: #{tpu_custom_call.1} parent=35 // pred_check
          %p241 = pneg %p62
        $region42: #{tpu_custom_call.1} parent=35 // pred_check_branch
          %243 = sbr.rel (%p241) target = $region44
        $region43: #{tpu_custom_call.1} parent=35 // pred_region
          %p244 = scmp.lt.s32.totalorder %s16, 1
          %s245 = scalar_select %p244, %s16, 1
          %s246 = smul.addr %s245, 2
          %s247 = smul.addr %s246, 2
          %s248 = scalar_lea.vmem %s1, %s247
        $region44: #{tpu_custom_call.1} parent=35 // pred_fallthru
          _
      $region36: #{tpu_custom_call.1} parent=5 // pred_fallthru
        _
      %p249 = scmp.le.s32.totalorder 1, %s16
      %p250 = scmp.lt.s32.totalorder %s16, 3
      %p251 = pnand %p249, %p250
      %p252 = pneg %p251
      // Predicated region
      $region45: #{tpu_custom_call.1} parent=5 // pred_check
        _
      $region46: #{tpu_custom_call.1} parent=5 // pred_check_branch
        %254 = sbr.rel (%p251) target = $region48
      $region47: #{tpu_custom_call.1} parent=5 // pred_region
        %s255 = ssub.s32 %s16, 1
        %p256 = scmp.lt.s32.totalorder %s21, 1
        %s257 = scalar_select %p256, %s21, 1
        %s258 = smul.addr %s257, 2
        %s259 = smul.addr %s258, 2
        %s260 = scalar_lea.vmem %s0, %s259
        %p261 = pneg %p42
        %p262 = pneg %p39
        %p263 = scmp.lt.s32.totalorder %s21, 1
        %s264 = scalar_select %p263, %s21, 1
        %s265 = smul.addr %s264, 2
        %s266 = smul.addr %s265, 2
        %s267 = scalar_lea.vmem %s1, %s266
        %p268 = pneg %p68
        %p269 = pneg %p65
        %p270 = pneg %p89
        %p271 = pneg %p86
        %p272 = pneg %p110
        %p273 = pneg %p107
        %p274 = pneg %p131
        %p275 = pneg %p128
        %p276 = pneg %p152
        %p277 = pneg %p149
        %p278 = pneg %p173
        %p279 = pneg %p170
        %p280 = pneg %p199
        %p281 = pneg %p196
        %s282 = sand.u32 %s186, 1
        %s283 = scalar_lea.sflag [#allocation4], %s282
        %s284 = sand.u32 %s186, 1
        %s285 = smul.addr %s284, 16
        %s286 = scalar_lea.vmem [#allocation3], %s285
        %p287 = scmp.lt.s32.totalorder %s21, 1
        %s288 = scalar_select %p287, %s21, 1
        %s289 = smul.addr %s288, 2
        %s290 = smul.addr %s289, 2
        %s291 = scalar_lea.vmem %s0, %s290
        %p292 = scmp.lt.s32.totalorder %s21, 1
        %s293 = scalar_select %p292, %s21, 1
        %s294 = smul.addr %s293, 2
        %s295 = smul.addr %s294, 2
        %s296 = scalar_lea.vmem %s1, %s295
        %v298 = vld [vmem:[%s291] sm:$0xf]
        %v299 = vld [vmem:[%s296] sm:$0xf]
        %v300 = vld [vmem:[%s2] sm:$0xf]
        %v303 = vunpack.c.l.s4 1983009808
        %v304 = vunpack.c.0.s8 %v303
        %v305 = vlaneseq
        %v306 = vshrl.u32 %v305, 7
        %v307 = vsub.s32 %v304, %v306
        %v308 = vrot.slane %v298, %v307
        %v309 = vcombine.high %v308, %v308
        %vm310 = vcmask 31744
        %v312 = vsel %vm310, %v300, 0
        %vm314 = vcmask 1041408
        %v316 = vsel %vm314, %v308, 0
        %v319 = vsel %vm314, %v309, 0
        %321 = vmatprep.subr.bf16.mxu0 %v319
        %322 = vmatpush1.bf16.msra.mxu0 %v316
        %323 = vmatprep.subr.bf16.mxu0 0
        %324 = vmatpush1.bf16.msra.mxu0 0
        %325 = vmatprep.subr.bf16.mxu0 0
        %326 = vmatpush1.bf16.msra.mxu0 0
        %327 = vmatprep.subr.bf16.mxu0 0
        %328 = vmatpush1.bf16.msra.mxu0 0
        %329 = vmatprep.subr.bf16.mxu0 0
        %330 = vmatpush1.bf16.msra.mxu0 0
        %331 = vmatprep.subr.bf16.mxu0 0
        %332 = vmatpush1.bf16.msra.mxu0 0
        %333 = vmatprep.subr.bf16.mxu0 0
        %334 = vmatpush1.bf16.msra.mxu0 0
        %335 = vmatprep.subr.bf16.mxu0 0
        %336 = vmatpush1.bf16.msra.mxu0 0
        %337 = vmatprep.subr.bf16.mxu0 0
        %338 = vmatpush1.bf16.msra.mxu0 0
        %339 = vmatprep.subr.bf16.mxu0 0
        %340 = vmatpush1.bf16.msra.mxu0 0
        %341 = vmatprep.subr.bf16.mxu0 0
        %342 = vmatpush1.bf16.msra.mxu0 0
        %343 = vmatprep.subr.bf16.mxu0 0
        %344 = vmatpush1.bf16.msra.mxu0 0
        %345 = vmatprep.subr.bf16.mxu0 0
        %346 = vmatpush1.bf16.msra.mxu0 0
        %347 = vmatprep.subr.bf16.mxu0 0
        %348 = vmatpush1.bf16.msra.mxu0 0
        %349 = vmatprep.subr.bf16.mxu0 0
        %350 = vmatpush1.bf16.msra.mxu0 0
        %351 = vmatprep.subr.bf16.mxu0 0
        %352 = vmatpush1.bf16.msra.mxu0 0
        %353 = vmatprep.mubr.bf16.mxu0 0
        %354 = vmatmul.mubr.bf16.gmra.mrb[0].mxu0 %v312
        %v355 = vpop.f32.mrb[0].mxu0
        %v356 = vadd.f32 0.0, %v355
        %v357 = vpop.f32.mrb[0].mxu0
        %v358 = vadd.f32 0.0, %v357
        %v359 = vpop.f32.mrb[0].mxu0
        %v360 = vpop.f32.mrb[0].mxu0
        %361 = vdwg.mxu0
        %v362 = vld [vmem:[%s3] sm:$0xf]
        %v363 = vld [vmem:[%s5] sm:$0xff]
        %365 = vset.pattern.permute.xlu0 0
        %366 = vperm.xlu0 %365, %v363
        %v367 = vpop.permute.xlu0 %366
        %v371 = vunpack.c.l.s4 1983009808
        %v372 = vunpack.c.0.s8 %v371
        %v373 = vlaneseq
        %v374 = vshrl.u32 %v373, 7
        %v375 = vsub.s32 %v372, %v374
        %v376 = vrot.slane %v299, %v375
        %v377 = vcombine.high %v376, %v376
        %v379 = vsel %vm310, %v362, 0
        %v382 = vsel %vm314, %v376, 0
        %v385 = vsel %vm314, %v377, 0
        %387 = vmatprep.subr.bf16.mxu0 %v385
        %388 = vmatpush1.bf16.msra.mxu0 %v382
        %389 = vmatprep.subr.bf16.mxu0 0
        %390 = vmatpush1.bf16.msra.mxu0 0
        %391 = vmatprep.subr.bf16.mxu0 0
        %392 = vmatpush1.bf16.msra.mxu0 0
        %393 = vmatprep.subr.bf16.mxu0 0
        %394 = vmatpush1.bf16.msra.mxu0 0
        %395 = vmatprep.subr.bf16.mxu0 0
        %396 = vmatpush1.bf16.msra.mxu0 0
        %397 = vmatprep.subr.bf16.mxu0 0
        %398 = vmatpush1.bf16.msra.mxu0 0
        %399 = vmatprep.subr.bf16.mxu0 0
        %400 = vmatpush1.bf16.msra.mxu0 0
        %401 = vmatprep.subr.bf16.mxu0 0
        %402 = vmatpush1.bf16.msra.mxu0 0
        %403 = vmatprep.subr.bf16.mxu0 0
        %404 = vmatpush1.bf16.msra.mxu0 0
        %405 = vmatprep.subr.bf16.mxu0 0
        %406 = vmatpush1.bf16.msra.mxu0 0
        %407 = vmatprep.subr.bf16.mxu0 0
        %408 = vmatpush1.bf16.msra.mxu0 0
        %409 = vmatprep.subr.bf16.mxu0 0
        %410 = vmatpush1.bf16.msra.mxu0 0
        %411 = vmatprep.subr.bf16.mxu0 0
        %412 = vmatpush1.bf16.msra.mxu0 0
        %413 = vmatprep.subr.bf16.mxu0 0
        %414 = vmatpush1.bf16.msra.mxu0 0
        %415 = vmatprep.subr.bf16.mxu0 0
        %416 = vmatpush1.bf16.msra.mxu0 0
        %417 = vmatprep.subr.bf16.mxu0 0
        %418 = vmatpush1.bf16.msra.mxu0 0
        %419 = vmatprep.mubr.bf16.mxu0 0
        %420 = vmatmul.mubr.bf16.gmra.mrb[0].mxu0 %v379
        %v421 = vpop.f32.mrb[0].mxu0
        %v422 = vadd.f32 %v367, %v421
        %v423 = vpop.f32.mrb[0].mxu0
        %v424 = vadd.f32 %v367, %v423
        %v425 = vpop.f32.mrb[0].mxu0
        %v426 = vpop.f32.mrb[0].mxu0
        %427 = vdwg.mxu0
        %vm428 = vcmask 519168
        %429 = vst.msk [vmem:[#allocation2] sm:$0xf] %vm428, 0
        %vm430 = vcmask 1043968
        %431 = vst.msk [vmem:[#allocation2 + $0x8] sm:$0xf] %vm430, 0
        %v432 = vpack.c.bf16 %v422, %v422
        %v433 = vpack.c.bf16 %v424, %v424
        %v436 = vunpack.c.l.b16 %v432
        %v437 = vunpack.c.l.b16 %v433
        %v438 = vpack.c.b16 %v437, %v436
        %439 = vrot.lane.b32.xlu0 %v438, 64
        %v440 = vpop.permute.xlu0 %439
        %v441 = vrot.slane %v440, 4
        %vm442 = vcmask 523264
        %v443 = vsel %vm442, %v441, %v440
        %vm446 = vcmask 1047556
        %vm447 = vmor %vm446, %vm430
        %448 = vst.msk [vmem:[#allocation2] sm:$0xff] %vm447, %v443
        %449 = vst.msk [vmem:[#allocation2 + $0x8] sm:$0xf] %vm428, %v441
        %v450 = vld [vmem:[%s4] sm:$0xf]
        %v451 = vld [vmem:[#allocation2] sm:$0xff]
        %s452 = scalar_lea.vmem %s4, 4
        %v453 = vld [vmem:[%s452] sm:$0xf]
        %v454 = vld [vmem:[#allocation2] sm:$0xff]
        %v455 = vld [vmem:[#allocation2 + $0x8] sm:$0xf]
        %v458 = vunpack.c.l.b16 %v454
        %v459 = vunpack.c.h.b16 %v454
        %v460 = vunpack.c.l.b16 %v455
        %v461 = vpack.c.b16 %v458, %v458
        %v462 = vpack.c.b16 %v459, %v459
        %v463 = vpack.c.b16 %v460, %v460
        %464 = vrot.lane.b32.xlu0 %v461, 112
        %v465 = vpop.permute.xlu0 %464
        %466 = vrot.lane.b32.xlu0 %v462, 112
        %v467 = vpop.permute.xlu0 %466
        %468 = vrot.lane.b32.xlu0 %v463, 112
        %v469 = vpop.permute.xlu0 %468
        %vm470 = vcmask 916480
        %v471 = vsel %vm470, %v465, %v467
        %v472 = vsel %vm470, %v467, %v469
        %vm473 = vcmask 64512
        %v475 = vsel %vm473, %v453, 0
        %vm477 = vcmask 1043456
        %v479 = vsel %vm477, %v471, 0
        %v482 = vsel %vm477, %v472, 0
        %484 = vmatprep.subr.bf16.mxu0 %v482
        %485 = vmatpush1.bf16.msra.mxu0 %v479
        %486 = vmatprep.subr.bf16.mxu0 0
        %487 = vmatpush1.bf16.msra.mxu0 0
        %488 = vmatprep.subr.bf16.mxu0 0
        %489 = vmatpush1.bf16.msra.mxu0 0
        %490 = vmatprep.subr.bf16.mxu0 0
        %491 = vmatpush1.bf16.msra.mxu0 0
        %492 = vmatprep.subr.bf16.mxu0 0
        %493 = vmatpush1.bf16.msra.mxu0 0
        %494 = vmatprep.subr.bf16.mxu0 0
        %495 = vmatpush1.bf16.msra.mxu0 0
        %496 = vmatprep.subr.bf16.mxu0 0
        %497 = vmatpush1.bf16.msra.mxu0 0
        %498 = vmatprep.subr.bf16.mxu0 0
        %499 = vmatpush1.bf16.msra.mxu0 0
        %500 = vmatprep.subr.bf16.mxu0 0
        %501 = vmatpush1.bf16.msra.mxu0 0
        %502 = vmatprep.subr.bf16.mxu0 0
        %503 = vmatpush1.bf16.msra.mxu0 0
        %504 = vmatprep.subr.bf16.mxu0 0
        %505 = vmatpush1.bf16.msra.mxu0 0
        %506 = vmatprep.subr.bf16.mxu0 0
        %507 = vmatpush1.bf16.msra.mxu0 0
        %508 = vmatprep.subr.bf16.mxu0 0
        %509 = vmatpush1.bf16.msra.mxu0 0
        %510 = vmatprep.subr.bf16.mxu0 0
        %511 = vmatpush1.bf16.msra.mxu0 0
        %512 = vmatprep.subr.bf16.mxu0 0
        %513 = vmatpush1.bf16.msra.mxu0 0
        %514 = vmatprep.subr.bf16.mxu0 0
        %515 = vmatpush1.bf16.msra.mxu0 0
        %516 = vmatprep.mubr.bf16.mxu0 0
        %517 = vmatmul.mubr.bf16.gmra.mrb[0].mxu0 %v475
        %v518 = vpop.f32.mrb[0].mxu0
        %v519 = vadd.f32 0.0, %v518
        %v520 = vpop.f32.mrb[0].mxu0
        %v521 = vadd.f32 0.0, %v520
        %v522 = vpop.f32.mrb[0].mxu0
        %v523 = vpop.f32.mrb[0].mxu0
        %524 = vdwg.mxu0
        %v526 = vunpack.c.l.b16 %v451
        %v527 = vunpack.c.h.b16 %v451
        %v528 = vpack.c.b16 %v526, %v526
        %v529 = vpack.c.b16 %v527, %v527
        %v531 = vsel %vm473, %v450, 0
        %v534 = vsel %vm477, %v528, 0
        %v537 = vsel %vm477, %v529, 0
        %539 = vmatprep.subr.bf16.mxu0 %v537
        %540 = vmatpush1.bf16.msra.mxu0 %v534
        %541 = vmatprep.subr.bf16.mxu0 0
        %542 = vmatpush1.bf16.msra.mxu0 0
        %543 = vmatprep.subr.bf16.mxu0 0
        %544 = vmatpush1.bf16.msra.mxu0 0
        %545 = vmatprep.subr.bf16.mxu0 0
        %546 = vmatpush1.bf16.msra.mxu0 0
        %547 = vmatprep.subr.bf16.mxu0 0
        %548 = vmatpush1.bf16.msra.mxu0 0
        %549 = vmatprep.subr.bf16.mxu0 0
        %550 = vmatpush1.bf16.msra.mxu0 0
        %551 = vmatprep.subr.bf16.mxu0 0
        %552 = vmatpush1.bf16.msra.mxu0 0
        %553 = vmatprep.subr.bf16.mxu0 0
        %554 = vmatpush1.bf16.msra.mxu0 0
        %555 = vmatprep.subr.bf16.mxu0 0
        %556 = vmatpush1.bf16.msra.mxu0 0
        %557 = vmatprep.subr.bf16.mxu0 0
        %558 = vmatpush1.bf16.msra.mxu0 0
        %559 = vmatprep.subr.bf16.mxu0 0
        %560 = vmatpush1.bf16.msra.mxu0 0
        %561 = vmatprep.subr.bf16.mxu0 0
        %562 = vmatpush1.bf16.msra.mxu0 0
        %563 = vmatprep.subr.bf16.mxu0 0
        %564 = vmatpush1.bf16.msra.mxu0 0
        %565 = vmatprep.subr.bf16.mxu0 0
        %566 = vmatpush1.bf16.msra.mxu0 0
        %567 = vmatprep.subr.bf16.mxu0 0
        %568 = vmatpush1.bf16.msra.mxu0 0
        %569 = vmatprep.subr.bf16.mxu0 0
        %570 = vmatpush1.bf16.msra.mxu0 0
        %571 = vmatprep.mubr.bf16.mxu0 0
        %572 = vmatmul.mubr.bf16.gmra.mrb[0].mxu0 %v531
        %v573 = vpop.f32.mrb[0].mxu0
        %v574 = vadd.f32 %v519, %v573
        %v575 = vpop.f32.mrb[0].mxu0
        %v576 = vadd.f32 %v521, %v575
        %v577 = vpop.f32.mrb[0].mxu0
        %v578 = vpop.f32.mrb[0].mxu0
        %579 = vdwg.mxu0
        %s580 = scalar_lea.vmem %s4, 8
        %v581 = vld [vmem:[%s580] sm:$0xf]
        %582 = vrot.lane.b32.xlu0 %v461, 96
        %v583 = vpop.permute.xlu0 %582
        %584 = vrot.lane.b32.xlu0 %v462, 96
        %v585 = vpop.permute.xlu0 %584
        %586 = vrot.lane.b32.xlu0 %v463, 96
        %v587 = vpop.permute.xlu0 %586
        %vm588 = vcmask 785408
        %v589 = vsel %vm588, %v583, %v585
        %v590 = vsel %vm588, %v585, %v587
        %v592 = vsel %vm473, %v581, 0
        %v595 = vsel %vm477, %v589, 0
        %v598 = vsel %vm477, %v590, 0
        %600 = vmatprep.subr.bf16.mxu0 %v598
        %601 = vmatpush1.bf16.msra.mxu0 %v595
        %602 = vmatprep.subr.bf16.mxu0 0
        %603 = vmatpush1.bf16.msra.mxu0 0
        %604 = vmatprep.subr.bf16.mxu0 0
        %605 = vmatpush1.bf16.msra.mxu0 0
        %606 = vmatprep.subr.bf16.mxu0 0
        %607 = vmatpush1.bf16.msra.mxu0 0
        %608 = vmatprep.subr.bf16.mxu0 0
        %609 = vmatpush1.bf16.msra.mxu0 0
        %610 = vmatprep.subr.bf16.mxu0 0
        %611 = vmatpush1.bf16.msra.mxu0 0
        %612 = vmatprep.subr.bf16.mxu0 0
        %613 = vmatpush1.bf16.msra.mxu0 0
        %614 = vmatprep.subr.bf16.mxu0 0
        %615 = vmatpush1.bf16.msra.mxu0 0
        %616 = vmatprep.subr.bf16.mxu0 0
        %617 = vmatpush1.bf16.msra.mxu0 0
        %618 = vmatprep.subr.bf16.mxu0 0
        %619 = vmatpush1.bf16.msra.mxu0 0
        %620 = vmatprep.subr.bf16.mxu0 0
        %621 = vmatpush1.bf16.msra.mxu0 0
        %622 = vmatprep.subr.bf16.mxu0 0
        %623 = vmatpush1.bf16.msra.mxu0 0
        %624 = vmatprep.subr.bf16.mxu0 0
        %625 = vmatpush1.bf16.msra.mxu0 0
        %626 = vmatprep.subr.bf16.mxu0 0
        %627 = vmatpush1.bf16.msra.mxu0 0
        %628 = vmatprep.subr.bf16.mxu0 0
        %629 = vmatpush1.bf16.msra.mxu0 0
        %630 = vmatprep.subr.bf16.mxu0 0
        %631 = vmatpush1.bf16.msra.mxu0 0
        %632 = vmatprep.mubr.bf16.mxu0 0
        %633 = vmatmul.mubr.bf16.gmra.mrb[0].mxu0 %v592
        %v634 = vpop.f32.mrb[0].mxu0
        %v635 = vadd.f32 0.0, %v634
        %v636 = vpop.f32.mrb[0].mxu0
        %v637 = vadd.f32 0.0, %v636
        %v638 = vpop.f32.mrb[0].mxu0
        %v639 = vpop.f32.mrb[0].mxu0
        %640 = vdwg.mxu0
        %v641 = vadd.f32 %v574, %v635
        %v642 = vadd.f32 %v576, %v637
        %s643 = scalar_lea.vmem %s4, 12
        %v644 = vld [vmem:[%s643] sm:$0xf]
        %645 = vrot.lane.b32.xlu0 %v461, 80
        %v646 = vpop.permute.xlu0 %645
        %647 = vrot.lane.b32.xlu0 %v462, 80
        %v648 = vpop.permute.xlu0 %647
        %649 = vrot.lane.b32.xlu0 %v463, 80
        %v650 = vpop.permute.xlu0 %649
        %vm651 = vcmask 654336
        %v652 = vsel %vm651, %v646, %v648
        %v653 = vsel %vm651, %v648, %v650
        %v655 = vsel %vm473, %v644, 0
        %v658 = vsel %vm477, %v652, 0
        %v661 = vsel %vm477, %v653, 0
        %663 = vmatprep.subr.bf16.mxu0 %v661
        %664 = vmatpush1.bf16.msra.mxu0 %v658
        %665 = vmatprep.subr.bf16.mxu0 0
        %666 = vmatpush1.bf16.msra.mxu0 0
        %667 = vmatprep.subr.bf16.mxu0 0
        %668 = vmatpush1.bf16.msra.mxu0 0
        %669 = vmatprep.subr.bf16.mxu0 0
        %670 = vmatpush1.bf16.msra.mxu0 0
        %671 = vmatprep.subr.bf16.mxu0 0
        %672 = vmatpush1.bf16.msra.mxu0 0
        %673 = vmatprep.subr.bf16.mxu0 0
        %674 = vmatpush1.bf16.msra.mxu0 0
        %675 = vmatprep.subr.bf16.mxu0 0
        %676 = vmatpush1.bf16.msra.mxu0 0
        %677 = vmatprep.subr.bf16.mxu0 0
        %678 = vmatpush1.bf16.msra.mxu0 0
        %679 = vmatprep.subr.bf16.mxu0 0
        %680 = vmatpush1.bf16.msra.mxu0 0
        %681 = vmatprep.subr.bf16.mxu0 0
        %682 = vmatpush1.bf16.msra.mxu0 0
        %683 = vmatprep.subr.bf16.mxu0 0
        %684 = vmatpush1.bf16.msra.mxu0 0
        %685 = vmatprep.subr.bf16.mxu0 0
        %686 = vmatpush1.bf16.msra.mxu0 0
        %687 = vmatprep.subr.bf16.mxu0 0
        %688 = vmatpush1.bf16.msra.mxu0 0
        %689 = vmatprep.subr.bf16.mxu0 0
        %690 = vmatpush1.bf16.msra.mxu0 0
        %691 = vmatprep.subr.bf16.mxu0 0
        %692 = vmatpush1.bf16.msra.mxu0 0
        %693 = vmatprep.subr.bf16.mxu0 0
        %694 = vmatpush1.bf16.msra.mxu0 0
        %695 = vmatprep.mubr.bf16.mxu0 0
        %696 = vmatmul.mubr.bf16.gmra.mrb[0].mxu0 %v655
        %v697 = vpop.f32.mrb[0].mxu0
        %v698 = vadd.f32 0.0, %v697
        %v699 = vpop.f32.mrb[0].mxu0
        %v700 = vadd.f32 0.0, %v699
        %v701 = vpop.f32.mrb[0].mxu0
        %v702 = vpop.f32.mrb[0].mxu0
        %703 = vdwg.mxu0
        %v704 = vadd.f32 %v641, %v698
        %v705 = vadd.f32 %v642, %v700
        %s706 = scalar_lea.vmem %s4, 16
        %v707 = vld [vmem:[%s706] sm:$0xf]
        %708 = vrot.lane.b32.xlu0 %v461, 64
        %v709 = vpop.permute.xlu0 %708
        %710 = vrot.lane.b32.xlu0 %v462, 64
        %v711 = vpop.permute.xlu0 %710
        %712 = vrot.lane.b32.xlu0 %v463, 64
        %v713 = vpop.permute.xlu0 %712
        %v714 = vsel %vm442, %v709, %v711
        %v715 = vsel %vm442, %v711, %v713
        %v717 = vsel %vm473, %v707, 0
        %v720 = vsel %vm477, %v714, 0
        %v723 = vsel %vm477, %v715, 0
        %725 = vmatprep.subr.bf16.mxu0 %v723
        %726 = vmatpush1.bf16.msra.mxu0 %v720
        %727 = vmatprep.subr.bf16.mxu0 0
        %728 = vmatpush1.bf16.msra.mxu0 0
        %729 = vmatprep.subr.bf16.mxu0 0
        %730 = vmatpush1.bf16.msra.mxu0 0
        %731 = vmatprep.subr.bf16.mxu0 0
        %732 = vmatpush1.bf16.msra.mxu0 0
        %733 = vmatprep.subr.bf16.mxu0 0
        %734 = vmatpush1.bf16.msra.mxu0 0
        %735 = vmatprep.subr.bf16.mxu0 0
        %736 = vmatpush1.bf16.msra.mxu0 0
        %737 = vmatprep.subr.bf16.mxu0 0
        %738 = vmatpush1.bf16.msra.mxu0 0
        %739 = vmatprep.subr.bf16.mxu0 0
        %740 = vmatpush1.bf16.msra.mxu0 0
        %741 = vmatprep.subr.bf16.mxu0 0
        %742 = vmatpush1.bf16.msra.mxu0 0
        %743 = vmatprep.subr.bf16.mxu0 0
        %744 = vmatpush1.bf16.msra.mxu0 0
        %745 = vmatprep.subr.bf16.mxu0 0
        %746 = vmatpush1.bf16.msra.mxu0 0
        %747 = vmatprep.subr.bf16.mxu0 0
        %748 = vmatpush1.bf16.msra.mxu0 0
        %749 = vmatprep.subr.bf16.mxu0 0
        %750 = vmatpush1.bf16.msra.mxu0 0
        %751 = vmatprep.subr.bf16.mxu0 0
        %752 = vmatpush1.bf16.msra.mxu0 0
        %753 = vmatprep.subr.bf16.mxu0 0
        %754 = vmatpush1.bf16.msra.mxu0 0
        %755 = vmatprep.subr.bf16.mxu0 0
        %756 = vmatpush1.bf16.msra.mxu0 0
        %757 = vmatprep.mubr.bf16.mxu0 0
        %758 = vmatmul.mubr.bf16.gmra.mrb[0].mxu0 %v717
        %v759 = vpop.f32.mrb[0].mxu0
        %v760 = vadd.f32 0.0, %v759
        %v761 = vpop.f32.mrb[0].mxu0
        %v762 = vadd.f32 0.0, %v761
        %v763 = vpop.f32.mrb[0].mxu0
        %v764 = vpop.f32.mrb[0].mxu0
        %765 = vdwg.mxu0
        %v766 = vadd.f32 %v704, %v760
        %v767 = vadd.f32 %v705, %v762
        %s768 = scalar_lea.vmem %s4, 20
        %v769 = vld [vmem:[%s768] sm:$0xf]
        %770 = vrot.lane.b32.xlu0 %v461, 48
        %v771 = vpop.permute.xlu0 %770
        %772 = vrot.lane.b32.xlu0 %v462, 48
        %v773 = vpop.permute.xlu0 %772
        %774 = vrot.lane.b32.xlu0 %v463, 48
        %v775 = vpop.permute.xlu0 %774
        %vm776 = vcmask 392192
        %v777 = vsel %vm776, %v771, %v773
        %v778 = vsel %vm776, %v773, %v775
        %v780 = vsel %vm473, %v769, 0
        %v783 = vsel %vm477, %v777, 0
        %v786 = vsel %vm477, %v778, 0
        %788 = vmatprep.subr.bf16.mxu0 %v786
        %789 = vmatpush1.bf16.msra.mxu0 %v783
        %790 = vmatprep.subr.bf16.mxu0 0
        %791 = vmatpush1.bf16.msra.mxu0 0
        %792 = vmatprep.subr.bf16.mxu0 0
        %793 = vmatpush1.bf16.msra.mxu0 0
        %794 = vmatprep.subr.bf16.mxu0 0
        %795 = vmatpush1.bf16.msra.mxu0 0
        %796 = vmatprep.subr.bf16.mxu0 0
        %797 = vmatpush1.bf16.msra.mxu0 0
        %798 = vmatprep.subr.bf16.mxu0 0
        %799 = vmatpush1.bf16.msra.mxu0 0
        %800 = vmatprep.subr.bf16.mxu0 0
        %801 = vmatpush1.bf16.msra.mxu0 0
        %802 = vmatprep.subr.bf16.mxu0 0
        %803 = vmatpush1.bf16.msra.mxu0 0
        %804 = vmatprep.subr.bf16.mxu0 0
        %805 = vmatpush1.bf16.msra.mxu0 0
        %806 = vmatprep.subr.bf16.mxu0 0
        %807 = vmatpush1.bf16.msra.mxu0 0
        %808 = vmatprep.subr.bf16.mxu0 0
        %809 = vmatpush1.bf16.msra.mxu0 0
        %810 = vmatprep.subr.bf16.mxu0 0
        %811 = vmatpush1.bf16.msra.mxu0 0
        %812 = vmatprep.subr.bf16.mxu0 0
        %813 = vmatpush1.bf16.msra.mxu0 0
        %814 = vmatprep.subr.bf16.mxu0 0
        %815 = vmatpush1.bf16.msra.mxu0 0
        %816 = vmatprep.subr.bf16.mxu0 0
        %817 = vmatpush1.bf16.msra.mxu0 0
        %818 = vmatprep.subr.bf16.mxu0 0
        %819 = vmatpush1.bf16.msra.mxu0 0
        %820 = vmatprep.mubr.bf16.mxu0 0
        %821 = vmatmul.mubr.bf16.gmra.mrb[0].mxu0 %v780
        %v822 = vpop.f32.mrb[0].mxu0
        %v823 = vadd.f32 0.0, %v822
        %v824 = vpop.f32.mrb[0].mxu0
        %v825 = vadd.f32 0.0, %v824
        %v826 = vpop.f32.mrb[0].mxu0
        %v827 = vpop.f32.mrb[0].mxu0
        %828 = vdwg.mxu0
        %v829 = vadd.f32 %v766, %v823
        %v830 = vadd.f32 %v767, %v825
        %s831 = scalar_lea.vmem %s4, 24
        %v832 = vld [vmem:[%s831] sm:$0xf]
        %833 = vrot.lane.b32.xlu0 %v461, 32
        %v834 = vpop.permute.xlu0 %833
        %835 = vrot.lane.b32.xlu0 %v462, 32
        %v836 = vpop.permute.xlu0 %835
        %837 = vrot.lane.b32.xlu0 %v463, 32
        %v838 = vpop.permute.xlu0 %837
        %vm839 = vcmask 261120
        %v840 = vsel %vm839, %v834, %v836
        %v841 = vsel %vm839, %v836, %v838
        %v843 = vsel %vm473, %v832, 0
        %v846 = vsel %vm477, %v840, 0
        %v849 = vsel %vm477, %v841, 0
        %851 = vmatprep.subr.bf16.mxu0 %v849
        %852 = vmatpush1.bf16.msra.mxu0 %v846
        %853 = vmatprep.subr.bf16.mxu0 0
        %854 = vmatpush1.bf16.msra.mxu0 0
        %855 = vmatprep.subr.bf16.mxu0 0
        %856 = vmatpush1.bf16.msra.mxu0 0
        %857 = vmatprep.subr.bf16.mxu0 0
        %858 = vmatpush1.bf16.msra.mxu0 0
        %859 = vmatprep.subr.bf16.mxu0 0
        %860 = vmatpush1.bf16.msra.mxu0 0
        %861 = vmatprep.subr.bf16.mxu0 0
        %862 = vmatpush1.bf16.msra.mxu0 0
        %863 = vmatprep.subr.bf16.mxu0 0
        %864 = vmatpush1.bf16.msra.mxu0 0
        %865 = vmatprep.subr.bf16.mxu0 0
        %866 = vmatpush1.bf16.msra.mxu0 0
        %867 = vmatprep.subr.bf16.mxu0 0
        %868 = vmatpush1.bf16.msra.mxu0 0
        %869 = vmatprep.subr.bf16.mxu0 0
        %870 = vmatpush1.bf16.msra.mxu0 0
        %871 = vmatprep.subr.bf16.mxu0 0
        %872 = vmatpush1.bf16.msra.mxu0 0
        %873 = vmatprep.subr.bf16.mxu0 0
        %874 = vmatpush1.bf16.msra.mxu0 0
        %875 = vmatprep.subr.bf16.mxu0 0
        %876 = vmatpush1.bf16.msra.mxu0 0
        %877 = vmatprep.subr.bf16.mxu0 0
        %878 = vmatpush1.bf16.msra.mxu0 0
        %879 = vmatprep.subr.bf16.mxu0 0
        %880 = vmatpush1.bf16.msra.mxu0 0
        %881 = vmatprep.subr.bf16.mxu0 0
        %882 = vmatpush1.bf16.msra.mxu0 0
        %883 = vmatprep.mubr.bf16.mxu0 0
        %884 = vmatmul.mubr.bf16.gmra.mrb[0].mxu0 %v843
        %v885 = vpop.f32.mrb[0].mxu0
        %v886 = vadd.f32 0.0, %v885
        %v887 = vpop.f32.mrb[0].mxu0
        %v888 = vadd.f32 0.0, %v887
        %v889 = vpop.f32.mrb[0].mxu0
        %v890 = vpop.f32.mrb[0].mxu0
        %891 = vdwg.mxu0
        %v892 = vadd.f32 %v829, %v886
        %v893 = vadd.f32 %v830, %v888
        %s894 = scalar_lea.vmem %s4, 28
        %v895 = vld [vmem:[%s894] sm:$0xf]
        %896 = vrot.lane.b32.xlu0 %v461, 16
        %v897 = vpop.permute.xlu0 %896
        %898 = vrot.lane.b32.xlu0 %v462, 16
        %v899 = vpop.permute.xlu0 %898
        %900 = vrot.lane.b32.xlu0 %v463, 16
        %v901 = vpop.permute.xlu0 %900
        %vm902 = vcmask 130048
        %v903 = vsel %vm902, %v897, %v899
        %v904 = vsel %vm902, %v899, %v901
        %v906 = vsel %vm473, %v895, 0
        %v909 = vsel %vm477, %v903, 0
        %v912 = vsel %vm477, %v904, 0
        %914 = vmatprep.subr.bf16.mxu0 %v912
        %915 = vmatpush1.bf16.msra.mxu0 %v909
        %916 = vmatprep.subr.bf16.mxu0 0
        %917 = vmatpush1.bf16.msra.mxu0 0
        %918 = vmatprep.subr.bf16.mxu0 0
        %919 = vmatpush1.bf16.msra.mxu0 0
        %920 = vmatprep.subr.bf16.mxu0 0
        %921 = vmatpush1.bf16.msra.mxu0 0
        %922 = vmatprep.subr.bf16.mxu0 0
        %923 = vmatpush1.bf16.msra.mxu0 0
        %924 = vmatprep.subr.bf16.mxu0 0
        %925 = vmatpush1.bf16.msra.mxu0 0
        %926 = vmatprep.subr.bf16.mxu0 0
        %927 = vmatpush1.bf16.msra.mxu0 0
        %928 = vmatprep.subr.bf16.mxu0 0
        %929 = vmatpush1.bf16.msra.mxu0 0
        %930 = vmatprep.subr.bf16.mxu0 0
        %931 = vmatpush1.bf16.msra.mxu0 0
        %932 = vmatprep.subr.bf16.mxu0 0
        %933 = vmatpush1.bf16.msra.mxu0 0
        %934 = vmatprep.subr.bf16.mxu0 0
        %935 = vmatpush1.bf16.msra.mxu0 0
        %936 = vmatprep.subr.bf16.mxu0 0
        %937 = vmatpush1.bf16.msra.mxu0 0
        %938 = vmatprep.subr.bf16.mxu0 0
        %939 = vmatpush1.bf16.msra.mxu0 0
        %940 = vmatprep.subr.bf16.mxu0 0
        %941 = vmatpush1.bf16.msra.mxu0 0
        %942 = vmatprep.subr.bf16.mxu0 0
        %943 = vmatpush1.bf16.msra.mxu0 0
        %944 = vmatprep.subr.bf16.mxu0 0
        %945 = vmatpush1.bf16.msra.mxu0 0
        %946 = vmatprep.mubr.bf16.mxu0 0
        %947 = vmatmul.mubr.bf16.gmra.mrb[0].mxu0 %v906
        %v948 = vpop.f32.mrb[0].mxu0
        %v949 = vadd.f32 0.0, %v948
        %v950 = vpop.f32.mrb[0].mxu0
        %v951 = vadd.f32 0.0, %v950
        %v952 = vpop.f32.mrb[0].mxu0
        %v953 = vpop.f32.mrb[0].mxu0
        %954 = vdwg.mxu0
        %v955 = vadd.f32 %v892, %v949
        %v956 = vadd.f32 %v893, %v951
        %s957 = scalar_lea.vmem %s4, 32
        %v958 = vld [vmem:[%s957] sm:$0xf]
        %v959 = vld [vmem:[#allocation2 + $0x4] sm:$0xff]
        %v961 = vunpack.c.l.b16 %v959
        %v962 = vunpack.c.h.b16 %v959
        %v963 = vpack.c.b16 %v961, %v961
        %v964 = vpack.c.b16 %v962, %v962
        %v966 = vsel %vm473, %v958, 0
        %v969 = vsel %vm477, %v963, 0
        %v972 = vsel %vm477, %v964, 0
        %974 = vmatprep.subr.bf16.mxu0 %v972
        %975 = vmatpush1.bf16.msra.mxu0 %v969
        %976 = vmatprep.subr.bf16.mxu0 0
        %977 = vmatpush1.bf16.msra.mxu0 0
        %978 = vmatprep.subr.bf16.mxu0 0
        %979 = vmatpush1.bf16.msra.mxu0 0
        %980 = vmatprep.subr.bf16.mxu0 0
        %981 = vmatpush1.bf16.msra.mxu0 0
        %982 = vmatprep.subr.bf16.mxu0 0
        %983 = vmatpush1.bf16.msra.mxu0 0
        %984 = vmatprep.subr.bf16.mxu0 0
        %985 = vmatpush1.bf16.msra.mxu0 0
        %986 = vmatprep.subr.bf16.mxu0 0
        %987 = vmatpush1.bf16.msra.mxu0 0
        %988 = vmatprep.subr.bf16.mxu0 0
        %989 = vmatpush1.bf16.msra.mxu0 0
        %990 = vmatprep.subr.bf16.mxu0 0
        %991 = vmatpush1.bf16.msra.mxu0 0
        %992 = vmatprep.subr.bf16.mxu0 0
        %993 = vmatpush1.bf16.msra.mxu0 0
        %994 = vmatprep.subr.bf16.mxu0 0
        %995 = vmatpush1.bf16.msra.mxu0 0
        %996 = vmatprep.subr.bf16.mxu0 0
        %997 = vmatpush1.bf16.msra.mxu0 0
        %998 = vmatprep.subr.bf16.mxu0 0
        %999 = vmatpush1.bf16.msra.mxu0 0
        %1000 = vmatprep.subr.bf16.mxu0 0
        %1001 = vmatpush1.bf16.msra.mxu0 0
        %1002 = vmatprep.subr.bf16.mxu0 0
        %1003 = vmatpush1.bf16.msra.mxu0 0
        %1004 = vmatprep.subr.bf16.mxu0 0
        %1005 = vmatpush1.bf16.msra.mxu0 0
        %1006 = vmatprep.mubr.bf16.mxu0 0
        %1007 = vmatmul.mubr.bf16.gmra.mrb[0].mxu0 %v966
        %v1008 = vpop.f32.mrb[0].mxu0
        %v1009 = vadd.f32 0.0, %v1008
        %v1010 = vpop.f32.mrb[0].mxu0
        %v1011 = vadd.f32 0.0, %v1010
        %v1012 = vpop.f32.mrb[0].mxu0
        %v1013 = vpop.f32.mrb[0].mxu0
        %1014 = vdwg.mxu0
        %v1015 = vadd.f32 %v955, %v1009
        %v1016 = vadd.f32 %v956, %v1011
        %v1017 = vadd.f32 %v1015, %v356
        %v1018 = vadd.f32 %v1016, %v358
        %v1019 = vld [vmem:[%s6] sm:$0xff]
        %1021 = vset.pattern.permute.xlu0 0
        %1022 = vperm.xlu0 %1021, %v1019
        %v1023 = vpop.permute.xlu0 %1022
        %v1025 = vadd.f32 %v1017, %v1023
        %v1026 = vadd.f32 %v1018, %v1023
        %v1027 = vmax.f32 %v1025, 0.0
        %v1028 = vmax.f32 %v1026, 0.0
        %1029 = vst [vmem:[%s286] sm:$0xff] %v1027
        %1030 = vst [vmem:[%s286 + $0x8] sm:$0xff] %v1028
        %s1031 = sand.u32 %s186, 1
        %s1032 = scalar_lea.sflag [#allocation4], %s1031
        %s1033 = sand.u32 %s186, 1
        %s1034 = smul.addr %s1033, 16
        %s1035 = scalar_lea.vmem [#allocation3], %s1034
        // Predicated region
        $region49: #{tpu_custom_call.1} parent=47 // pred_check
          %p1036 = pneg %p196
        $region50: #{tpu_custom_call.1} parent=47 // pred_check_branch
          %1038 = sbr.rel (%p1036) target = $region52
        $region51: #{tpu_custom_call.1} parent=47 // pred_region
          %s1040 = ssub.s32 256, 256
          %1041 = vsyncadd %s1032, %s1040
          %s1042 = smul.addr %s21, 2
          %s1043 = smul.addr %s1042, 128
          %s1044 = scalar_lea.hbm %s7, %s1043
          %s1046 = sshll.u32 %s1035, 4
          %s1047 = int_to_ptr.vmem [resolvable:$true] %s1046
          %1049 = dma.vmem_to_hbm [thread:$0]  %s1047, 256, %s1044, %s1032
        $region52: #{tpu_custom_call.1} parent=47 // pred_fallthru
          _
      $region48: #{tpu_custom_call.1} parent=5 // pred_fallthru
        _
      %p1050 = scmp.le.s32.totalorder 2, %s16
      // Predicated region
      $region53: #{tpu_custom_call.1} parent=5 // pred_check
        %p1051 = pneg %p1050
      $region54: #{tpu_custom_call.1} parent=5 // pred_check_branch
        %1053 = sbr.rel (%p1051) target = $region56
      $region55: #{tpu_custom_call.1} parent=5 // pred_region
        %s1054 = ssub.s32 %s16, 2
        // Predicated region
        $region57: #{tpu_custom_call.1} parent=55 // pred_check
          %p1055 = pneg %p202
        $region58: #{tpu_custom_call.1} parent=55 // pred_check_branch
          %1057 = sbr.rel (%p1055) target = $region60
        $region59: #{tpu_custom_call.1} parent=55 // pred_region
          %s1058 = sand.u32 %s187, 1
          %s1059 = scalar_lea.sflag [#allocation4], %s1058
          %s1060 = sand.u32 %s187, 1
          %s1061 = smul.addr %s1060, 16
          %s1062 = scalar_lea.vmem [#allocation3], %s1061
          %1063 = dma.done %s1059, 256
        $region60: #{tpu_custom_call.1} parent=55 // pred_fallthru
          _
      $region56: #{tpu_custom_call.1} parent=5 // pred_fallthru
        _
    $region6: #{tpu_custom_call.1} parent=1 // loop_footer
      %s20 = sadd.s32 1, %s16
    $region7: #{tpu_custom_call.1} parent=1 // loop_footer_branch
      %15 = sbr.rel target = $region3
    $region8: #{tpu_custom_call.1} parent=1 // loop_exit
      _
    %1064 = vsyncpa [#allocation4], 1
    %s1065 = scalar_lea.sflag [#allocation4], 1
    %1066 = vsyncpa %s1065, 1

</llo_original>
